<compile_context>
chip_gen: v6e
topology: v6e:2x2x1
jax: 0.10.0
libtpu: 0.0.40
codegen_flags: <defaults>
</compile_context>

<pallas_src>
import functools

import jax
import jax.numpy as jnp
from jax.experimental import pallas as pl
from jax.experimental.pallas import tpu as pltpu

LANES = 128        # lane dim (fixed by vreg)
TILE_ROWS = 2048   # sublane rows per grid step (1 MiB f32 / 256 KiB int8 tiles)


def _masked_bce_partial_kernel(x_ref, c_ref, o_ref, *, tile_rows, rows_valid, masked):
    """Accumulate per-(sublane,lane) partial sums of mask * bce_with_logits."""
    c = pl.program_id(0)          # parallel axis (per-TensorCore on v7x)
    j = pl.program_id(1)          # reduction axis (arbitrary, last)

    @pl.when(j == 0)
    def _():
        o_ref[...] = jnp.zeros_like(o_ref)

    x = x_ref[...].astype(jnp.float32)        # pred streams in its native dtype
    codef = c_ref[...].astype(jnp.float32)    # 0 = unused, 1 = selected neg, 2 = selected pos
    m = jnp.minimum(codef, 1.0)               # selection mask
    y = codef - m                             # label (1 only for code == 2)

    # Numerically stable BCE-with-logits (torch formulation):
    #   loss = max(x, 0) - x*y + log(1 + exp(-|x|))
    bce = jnp.maximum(x, 0.0) - x * y + jnp.log1p(jnp.exp(-jnp.abs(x)))
    contrib = m * bce

    if masked:
        # Last block is ragged: rows >= rows_valid hold unspecified DMA padding.
        row_start = (c * pl.num_programs(1) + j) * tile_rows
        row_ids = jax.lax.broadcasted_iota(jnp.int32, (tile_rows, LANES), 0)
        contrib = jnp.where(row_ids + row_start < rows_valid, contrib, 0.0)

    # Reduce only along sublane groups: (T,128) -> (T/8,8,128), sum axis 0.
    # Pure VPU adds in the hot loop; no cross-lane XLU work.
    o_ref[...] += contrib.reshape(tile_rows // 8, 8, LANES).sum(axis=0)


def _num_parallel_cores():
    """2-wide parallel grid axis only on v7x (2 TensorCores/chip), else 1."""
    try:
        kind = jax.devices()[0].device_kind.lower()
    except Exception:
        return 1
    return 2 if ("v7" in kind or "7x" in kind) else 1


def _masked_bce_sum(pred2d, code2d):
    rows, lanes = pred2d.shape
    assert lanes == LANES and rows % 8 == 0

    tile_rows = min(TILE_ROWS, rows)                 # clamp for small inputs
    total_blocks = -(-rows // tile_rows)
    num_cores = _num_parallel_cores()
    if total_blocks < num_cores or total_blocks % num_cores != 0:
        num_cores = 1                                # keep every block in range / balanced
    inner = total_blocks // num_cores
    masked = total_blocks * tile_rows != rows        # ragged last block?

    kernel = functools.partial(_masked_bce_partial_kernel,
                               tile_rows=tile_rows, rows_valid=rows, masked=masked)
    idx_map = lambda c, j: (c * inner + j, 0)

    partials = pl.pallas_call(
        kernel,
        out_shape=jax.ShapeDtypeStruct((num_cores * 8, LANES), jnp.float32),
        grid_spec=pltpu.PrefetchScalarGridSpec(
            num_scalar_prefetch=0,
            grid=(num_cores, inner),
            in_specs=[pl.BlockSpec((tile_rows, LANES), idx_map),
                      pl.BlockSpec((tile_rows, LANES), idx_map)],
            out_specs=pl.BlockSpec((8, LANES), lambda c, j: (c, 0)),
        ),
        compiler_params=pltpu.CompilerParams(
            dimension_semantics=("parallel", "arbitrary")),
    )(pred2d, code2d)
    # Tiny (<= 2*8*128 elems) reduce; fuses into the wrapper's epilogue fusion.
    return jnp.sum(partials)


def _even_sample_code(target_flat, key):
    """Device-side even_sample() as a dense int8 selection code.

    0 = not selected, 1 = selected negative (label 0), 2 = selected positive
    (label 1).  n = min(#pos, #neg) elements of each class are kept, chosen
    uniformly at random via a rank threshold on random priorities (one sort per
    class instead of four argsorts).  Returns (code, exact selected count).
    """
    n_total = target_flat.shape[0]
    pos = target_flat == 1.0
    neg = target_flat == 0.0
    n = jnp.minimum(jnp.sum(pos, dtype=jnp.int32), jnp.sum(neg, dtype=jnp.int32))

    kp, kn = jax.random.split(key)
    sentinel = jnp.int32(2**31 - 1)   # strictly above any in-class priority
    # 30-bit random priorities; priority ties are ~1e-3 likely and only perturb
    # the sample count by O(1), which is statistically irrelevant for the mean.
    pr_p = jnp.where(pos, (jax.random.bits(kp, (n_total,), jnp.uint32) >> 2).astype(jnp.int32), sentinel)
    pr_n = jnp.where(neg, (jax.random.bits(kn, (n_total,), jnp.uint32) >> 2).astype(jnp.int32), sentinel)

    idx = jnp.maximum(n - 1, 0)
    thr_p = jnp.where(n > 0, jnp.sort(pr_p)[idx], jnp.int32(-1))
    thr_n = jnp.where(n > 0, jnp.sort(pr_n)[idx], jnp.int32(-1))

    pos_sel = pos & (pr_p <= thr_p)
    neg_sel = neg & (pr_n <= thr_n)
    code = (pos_sel * 2 + neg_sel).astype(jnp.int8)
    count = jnp.sum(pos_sel, dtype=jnp.int32) + jnp.sum(neg_sel, dtype=jnp.int32)
    return code, count


@jax.jit
def _masked_mse_2d_loss_impl(pred, target, key):
    pred_flat = pred.reshape(-1)                     # keep native dtype (bf16-friendly)
    targ_flat = target.reshape(-1).astype(jnp.float32)
    code, count = _even_sample_code(targ_flat, key)

    n = pred_flat.shape[0]
    rem = (-n) % (8 * LANES)                         # keep rows % 8 == 0
    if rem:
        # TODO(synk): tiny tail copy only when numel % 1024 != 0; padded code==0
        # elements are excluded from the sum, so semantics are unchanged.
        pred_flat = jnp.pad(pred_flat, (0, rem))
        code = jnp.pad(code, (0, rem))
    pred2d = pred_flat.reshape(-1, LANES)            # free reshape, no pad copy
    code2d = code.reshape(-1, LANES)

    loss_sum = _masked_bce_sum(pred2d, code2d)
    cnt = count.astype(jnp.float32)
    mean_loss = jnp.where(cnt > 0, loss_sum / jnp.maximum(cnt, 1.0), jnp.nan)
    # torch: isnan/isinf check raises -> except -> 0.5 (also covers empty sample)
    return jnp.where(jnp.isfinite(mean_loss), mean_loss, jnp.float32(0.5))


def masked_mse_2d_loss(pred, target, *, sample_balance=True, key=None):
    """Forward pass of MaskedMSE2DLoss (sample_balance path)."""
    assert sample_balance, "sample_balance=False path is undefined in the torch module"
    if key is None:
        key = jax.random.PRNGKey(42)
    return _masked_mse_2d_loss_impl(pred, target, key)


if __name__ == "__main__":
    key = jax.random.PRNGKey(0)
    k_pred, k_targ, k_samp = jax.random.split(key, 3)

    # Shapes implied by the 2D loss over conv-style maps (NCHW).
    B, C, H, W = 2, 4, 16, 16
    pred = jax.random.normal(k_pred, (B, C, H, W), dtype=jnp.float32)           # logits
    target = jax.random.bernoulli(k_targ, 0.3, (B, C, H, W)).astype(jnp.float32)

    loss = masked_mse_2d_loss(pred, target, sample_balance=True, key=k_samp)
    loss = jax.block_until_ready(loss)
    assert loss.shape == () and bool(jnp.isfinite(loss))
    print("KERNEL_OK")
</pallas_src>

<mosaic_0001>
module attributes {stable_mosaic.version = 11 : i64} {
  func.func @_masked_bce_partial_kernel(%arg0: i32, %arg1: i32, %arg2: memref<16x128xf32, #tpu.memory_space<vmem>>, %arg3: memref<16x128xi8, #tpu.memory_space<vmem>>, %arg4: memref<8x128xf32, #tpu.memory_space<vmem>>) attributes {dimension_semantics = [#tpu.dimension_semantics<parallel>, #tpu.dimension_semantics<arbitrary>], iteration_bounds = array<i64: 1, 1>, scalar_prefetch = 0 : i64, scratch_operands = 0 : i64, tpu.core_type = #tpu.core_type<tc>, window_params = [{transform_indices = @transform_0, window_bounds = array<i64: 16, 128>}, {transform_indices = @transform_1, window_bounds = array<i64: 16, 128>}, {transform_indices = @transform_2, window_bounds = array<i64: 8, 128>}]} {
    %c0_i32 = arith.constant 0 : i32
    %0 = arith.cmpi eq, %arg1, %c0_i32 : i32
    %1 = arith.extui %0 : i1 to i32
    %c0_i32_0 = arith.constant 0 : i32
    %2 = arith.cmpi ne, %1, %c0_i32_0 : i32
    scf.if %2 {
      %cst_11 = arith.constant 0.000000e+00 : f32
      %25 = vector.broadcast %cst_11 : f32 to vector<8x128xf32>
      %c0_12 = arith.constant 0 : index
      %c0_13 = arith.constant 0 : index
      %26 = vector.load %arg4[%c0_12, %c0_13] : memref<8x128xf32, #tpu.memory_space<vmem>>, vector<8x128xf32>
      tpu.vector_store %arg4[%c0_12, %c0_13], %25 {strides = array<i32>} : memref<8x128xf32, #tpu.memory_space<vmem>>, vector<8x128xf32>,
    } else {
    }
    %c0 = arith.constant 0 : index
    %c0_1 = arith.constant 0 : index
    %3 = vector.load %arg2[%c0, %c0_1] : memref<16x128xf32, #tpu.memory_space<vmem>>, vector<16x128xf32>
    %c0_2 = arith.constant 0 : index
    %c0_3 = arith.constant 0 : index
    %4 = vector.load %arg3[%c0_2, %c0_3] : memref<16x128xi8, #tpu.memory_space<vmem>>, vector<16x128xi8>
    %5 = arith.sitofp %4 : vector<16x128xi8> to vector<16x128xf32>
    %cst = arith.constant 1.000000e+00 : f32
    %6 = vector.broadcast %cst : f32 to vector<16x128xf32>
    %7 = arith.minimumf %5, %6 : vector<16x128xf32>
    %8 = arith.subf %5, %7 : vector<16x128xf32>
    %cst_4 = arith.constant 0.000000e+00 : f32
    %9 = vector.broadcast %cst_4 : f32 to vector<16x128xf32>
    %10 = arith.maximumf %3, %9 : vector<16x128xf32>
    %11 = arith.mulf %3, %8 : vector<16x128xf32>
    %12 = arith.subf %10, %11 : vector<16x128xf32>
    %13 = math.absf %3 : vector<16x128xf32>
    %cst_5 = arith.constant 0.000000e+00 : f32
    %14 = vector.broadcast %cst_5 : f32 to vector<16x128xf32>
    %15 = arith.subf %14, %13 : vector<16x128xf32>
    %16 = math.exp %15 : vector<16x128xf32>
    %17 = math.log1p %16 : vector<16x128xf32>
    %18 = arith.addf %12, %17 : vector<16x128xf32>
    %19 = arith.mulf %7, %18 : vector<16x128xf32>
    %c0_6 = arith.constant 0 : index
    %c0_7 = arith.constant 0 : index
    %20 = vector.load %arg4[%c0_6, %c0_7] : memref<8x128xf32, #tpu.memory_space<vmem>>, vector<8x128xf32>
    %21 = vector.shape_cast %19 : vector<16x128xf32> to vector<2x8x128xf32>
    %cst_8 = arith.constant dense<0.000000e+00> : vector<8x128xf32>
    %22 = vector.multi_reduction <add>, %21, %cst_8 [0] : vector<2x8x128xf32> to vector<8x128xf32>
    %23 = arith.addf %20, %22 : vector<8x128xf32>
    %c0_9 = arith.constant 0 : index
    %c0_10 = arith.constant 0 : index
    %24 = vector.load %arg4[%c0_9, %c0_10] : memref<8x128xf32, #tpu.memory_space<vmem>>, vector<8x128xf32>
    tpu.vector_store %arg4[%c0_9, %c0_10], %23 {strides = array<i32>} : memref<8x128xf32, #tpu.memory_space<vmem>>, vector<8x128xf32>,
    return
  }
  func.func @transform_0(%arg0: i32, %arg1: i32) -> (i32, i32) {
    %c1_i32 = arith.constant 1 : i32
    %0 = arith.muli %arg0, %c1_i32 : i32
    %1 = arith.addi %0, %arg1 : i32
    %c0_i32 = arith.constant 0 : i32
    %c0_i32_0 = arith.constant 0 : i32
    return %1, %c0_i32 : i32, i32
  }
  func.func @transform_1(%arg0: i32, %arg1: i32) -> (i32, i32) {
    %c1_i32 = arith.constant 1 : i32
    %0 = arith.muli %arg0, %c1_i32 : i32
    %1 = arith.addi %0, %arg1 : i32
    %c0_i32 = arith.constant 0 : i32
    %c0_i32_0 = arith.constant 0 : i32
    return %1, %c0_i32 : i32, i32
  }
  func.func @transform_2(%arg0: i32, %arg1: i32) -> (i32, i32) {
    %c0_i32 = arith.constant 0 : i32
    %c0_i32_0 = arith.constant 0 : i32
    return %arg0, %c0_i32 : i32, i32
  }
}

</mosaic_0001>

<llo_original>
// kernel: _masked_mse_2d_loss_impl.1
$region0: #{_masked_mse_2d_loss_impl.1}
  #allocation0 [shape = 'u32[]', space=smem, size = 0x4, offset = 0x4, fixed_abs, tag = 'smem constant byte address 0x4 - core index']
  #allocation1 [shape = 'u32[144,128]{1,0:T(1,128)}', space=vmem, size = 0x12000, scoped, tag = 'internal scratch']
  %s0 = inlined_call_operand.vmem [shape: f32[16,128], index: 0, kind: input, shape index: {}]
  %s1 = inlined_call_operand.vmem [shape: s8[16,128], index: 1, kind: input, shape index: {}]
  %s2 = inlined_call_operand.vmem [shape: f32[8,128], index: 2, kind: output, shape index: {}]
  %s3 = sld [smem:[#allocation0]]
  $region22: #{_masked_mse_2d_loss_impl.1} parent=0
    _
  %s5 = ssub.s32 1, %s3
  %s6 = scalar_select 0, %s5, %s3
  // Predicated region
  $region2: #{_masked_mse_2d_loss_impl.1} parent=0 // pred_check
    _
  $region3: #{_masked_mse_2d_loss_impl.1} parent=0 // pred_check_branch
    %8 = sbr.rel (0) target = $region5
  $region4: #{_masked_mse_2d_loss_impl.1} parent=0 // pred_region
    %s9 = sadd.s32 0, 0
    %s10 = smul.u32 2, %s9
    %p11 = scmp.lt.s32.totalorder %s10, 1
    %s12 = scalar_select %p11, %s10, 1
    %s13 = smul.addr %s12, 8
    %s14 = scalar_lea.vmem %s0, %s13
    %s15 = sadd.s32 0, 0
    %s16 = smul.u32 2, %s15
  $region5: #{_masked_mse_2d_loss_impl.1} parent=0 // pred_fallthru
    _
  // Predicated region
  $region6: #{_masked_mse_2d_loss_impl.1} parent=0 // pred_check
    _
  $region7: #{_masked_mse_2d_loss_impl.1} parent=0 // pred_check_branch
    %18 = sbr.rel (0) target = $region9
  $region8: #{_masked_mse_2d_loss_impl.1} parent=0 // pred_region
    %s19 = sadd.s32 0, 0
    %s20 = smul.u32 2, %s19
    %p21 = scmp.lt.s32.totalorder %s20, 1
    %s22 = scalar_select %p21, %s20, 1
    %s23 = smul.addr %s22, 2
    %s24 = scalar_lea.vmem %s1, %s23
    %s25 = sadd.s32 0, 0
    %s26 = smul.u32 2, %s25
  $region9: #{_masked_mse_2d_loss_impl.1} parent=0 // pred_fallthru
    _
  %s27 = sadd.s32 0, 0
  %s28 = smul.u32 2, %s27
  %p29 = scmp.lt.s32.totalorder %s28, 1
  %s30 = scalar_select %p29, %s28, 1
  %s31 = smul.addr %s30, 8
  %s32 = scalar_lea.vmem %s0, %s31
  %s33 = sadd.s32 0, 0
  %s34 = smul.u32 2, %s33
  %p35 = scmp.lt.s32.totalorder %s34, 1
  %s36 = scalar_select %p35, %s34, 1
  %s37 = smul.addr %s36, 2
  %s38 = scalar_lea.vmem %s1, %s37
  %s39 = sadd.s32 0, 0
  %s40 = smul.u32 2, %s39
  %p41 = scmp.lt.s32.totalorder %s40, 1
  %s42 = scalar_select %p41, %s40, 1
  %s43 = smul.addr %s42, 8
  %s44 = scalar_lea.vmem %s0, %s43
  %s45 = sadd.s32 0, 0
  %s46 = smul.u32 2, %s45
  %s47 = sadd.s32 0, 0
  %s48 = smul.u32 2, %s47
  %p49 = scmp.lt.s32.totalorder %s48, 1
  %s50 = scalar_select %p49, %s48, 1
  %s51 = smul.addr %s50, 2
  %s52 = scalar_lea.vmem %s1, %s51
  %s53 = sadd.s32 0, 0
  %s54 = smul.u32 2, %s53
  %p55 = scmp.eq.s32.totalorder 0, 0
  // Predicated region
  $region10: #{_masked_mse_2d_loss_impl.1} parent=0 // pred_check
    %p56 = pneg %p55
  $region11: #{_masked_mse_2d_loss_impl.1} parent=0 // pred_check_branch
    %58 = sbr.rel (%p56) target = $region13
  $region12: #{_masked_mse_2d_loss_impl.1} parent=0 // pred_region
    %59 = vst [vmem:[%s2] sm:$0xff] 0.0
  $region13: #{_masked_mse_2d_loss_impl.1} parent=0 // pred_fallthru
    _
  %v60 = vld [vmem:[%s44] sm:$0xff]
  %v61 = vld [vmem:[%s44 + $0x8] sm:$0xff]
  %v62 = vld [vmem:[%s52] sm:$0x3]
  %v63 = vld [vmem:[%s52 + $0x2] sm:$0x3]
  %v64 = vunpack.c.0.s8 %v62
  %v65 = vunpack.c.0.s8 %v63
  %v66 = vcvt.s32.f32 %v64
  %v67 = vcvt.s32.f32 %v65
  %v68 = vmin.f32 %v66, 1.0
  %v69 = vmin.f32 %v67, 1.0
  %v70 = vsub.f32 %v66, %v68
  %v71 = vsub.f32 %v67, %v69
  %v72 = vmax.f32 %v60, 0.0
  %v73 = vmax.f32 %v61, 0.0
  %v74 = vmul.f32 %v60, %v70
  %v75 = vmul.f32 %v61, %v71
  %v76 = vsub.f32 %v72, %v74
  %v77 = vsub.f32 %v73, %v75
  %v78 = vand.u32 2147483647, %v60
  %v79 = vand.u32 2147483647, %v61
  %v80 = vsub.f32 0.0, %v78
  %v81 = vsub.f32 0.0, %v79
  %v82 = vmul.f32 %v80, 1.442695
  %v83 = vpow.pop %v82
  %v84 = vmul.f32 %v81, 1.442695
  %v85 = vpow.pop %v84
  %v86 = vadd.f32 %v83, 1.0
  %v87 = vlog2.pop %v86
  %v88 = vmul.f32 %v87, 0.6931472
  %v89 = vmul.f32 -0.5, %v83
  %v90 = vadd.f32 %v89, 1.0
  %v91 = vmul.f32 %v90, %v83
  %v92 = vand.u32 2147483647, %v83
  %vm93 = vcmp.lt.f32.partialorder %v92, 0.0004427343
  %v94 = vsel %vm93, %v91, %v88
  %v95 = vadd.f32 %v85, 1.0
  %v96 = vlog2.pop %v95
  %v97 = vmul.f32 %v96, 0.6931472
  %v98 = vmul.f32 -0.5, %v85
  %v99 = vadd.f32 %v98, 1.0
  %v100 = vmul.f32 %v99, %v85
  %v101 = vand.u32 2147483647, %v85
  %vm102 = vcmp.lt.f32.partialorder %v101, 0.0004427343
  %v103 = vsel %vm102, %v100, %v97
  %v104 = vadd.f32 %v76, %v94
  %v105 = vadd.f32 %v77, %v103
  %v106 = vmul.f32 %v68, %v104
  %v107 = vmul.f32 %v69, %v105
  %v108 = vld [vmem:[%s2] sm:$0xff]
  %v109 = vadd.f32 %v106, %v107
  %v110 = vadd.f32 %v108, %v109
  %111 = vst [vmem:[%s2] sm:$0xff] %v110
  // Predicated region
  $region14: #{_masked_mse_2d_loss_impl.1} parent=0 // pred_check
    _
  $region15: #{_masked_mse_2d_loss_impl.1} parent=0 // pred_check_branch
    %113 = sbr.rel (0) target = $region17
  $region16: #{_masked_mse_2d_loss_impl.1} parent=0 // pred_region
    _
  $region17: #{_masked_mse_2d_loss_impl.1} parent=0 // pred_fallthru
    _
  // Predicated region
  $region18: #{_masked_mse_2d_loss_impl.1} parent=0 // pred_check
    _
  $region19: #{_masked_mse_2d_loss_impl.1} parent=0 // pred_check_branch
    %115 = sbr.rel (0) target = $region21
  $region20: #{_masked_mse_2d_loss_impl.1} parent=0 // pred_region
    _
  $region21: #{_masked_mse_2d_loss_impl.1} parent=0 // pred_fallthru
    _

</llo_original>
